<compile_context>
chip_gen: v5e
topology: v5e:2x2
jax: 0.10.0
libtpu: 0.0.40
codegen_flags: <defaults>
</compile_context>

<pallas_src>
import math

import jax
import jax.numpy as jnp
from jax.experimental import pallas as pl
from jax.experimental.pallas import tpu as pltpu


def _round_up(n: int, m: int) -> int:
    return ((n + m - 1) // m) * m


def _cdiv(a: int, b: int) -> int:
    return -(-a // b)


# ---------------------------------------------------------------------------
# Chip-aware VMEM budget
# ---------------------------------------------------------------------------
_VMEM_CAP_CACHE = None


def _vmem_cap_bytes() -> int:
    """0.8 x physical VMEM per TensorCore (v5e/v6e ~102 MiB, v7x ~51 MiB);
    conservative 48 MiB fallback (v7x-safe) if the query is unavailable."""
    global _VMEM_CAP_CACHE
    if _VMEM_CAP_CACHE is None:
        cap = 48 << 20
        try:
            phys = int(getattr(pltpu.get_tpu_info(), "vmem_capacity_bytes", 0) or 0)
            if phys > 0:
                cap = int(0.8 * phys)
        except Exception:
            pass
        _VMEM_CAP_CACHE = cap
    return _VMEM_CAP_CACHE


def _padded_need(estimate: int) -> int:
    return int(1.3 * estimate) + (2 << 20)


def _vmem_limit(estimate: int) -> int:
    return min(max(_padded_need(estimate), 16 << 20), _vmem_cap_bytes())


def _resident_estimate(tm, D, dff, w_isz, io_isz):
    return (2 * D * dff * w_isz            # W1^T + W2^T, single resident copy
            + (dff + D) * 4                # biases (f32)
            + 4 * tm * D * io_isz          # x and out tiles, double-buffered
            + tm * dff * (4 + w_isz)       # f32 h + cast-to-compute-dtype copy
            + tm * D * 4)                  # f32 second-matmul result


def _tiled_estimate(tm, tkff, D, w_isz, io_isz):
    return (4 * D * tkff * w_isz           # W1/W2 dff slabs, double-buffered
            + 4 * tkff * 4 + D * 4         # b1 slabs + b2
            + 4 * tm * D * io_isz          # x and out tiles, double-buffered
            + tm * D * 4                   # f32 accumulator scratch
            + tm * tkff * (4 + w_isz))     # f32 h + cast copy


# ---------------------------------------------------------------------------
# Kernels
# ---------------------------------------------------------------------------
def _ffn_resident_kernel(x_ref, w1_ref, b1_ref, w2_ref, b2_ref, o_ref):
    # x_ref: (tm, D); w1_ref: (D, dff); w2_ref: (dff, D) in the MXU compute
    # dtype; b1_ref: (1, dff), b2_ref: (1, D) in f32.  Weights/biases are
    # whole-array VMEM residents (single copy).
    cdtype = w1_ref.dtype
    prec = jax.lax.Precision.HIGHEST if cdtype == jnp.float32 else None
    x = x_ref[...].astype(cdtype)

    h = jnp.dot(x, w1_ref[...], preferred_element_type=jnp.float32,
                precision=prec)
    # dropout: identity in eval mode (see TODO at top of file), then ReLU.
    h = jnp.maximum(h + b1_ref[...], 0.0)

    out = jnp.dot(h.astype(cdtype), w2_ref[...],
                  preferred_element_type=jnp.float32, precision=prec)
    o_ref[...] = (out + b2_ref[...]).astype(o_ref.dtype)


def _ffn_dff_tiled_kernel(x_ref, w1_ref, b1_ref, w2_ref, b2_ref, o_ref,
                          acc_ref):
    # grid = (M//tm, dff//tkff); j (dff) is the reduction axis for the second
    # matmul, accumulated in f32 scratch and finalized on the last j step.
    j = pl.program_id(1)

    @pl.when(j == 0)
    def _init():
        acc_ref[...] = jnp.zeros_like(acc_ref)

    cdtype = w1_ref.dtype
    prec = jax.lax.Precision.HIGHEST if cdtype == jnp.float32 else None
    x = x_ref[...].astype(cdtype)

    h = jnp.dot(x, w1_ref[...], preferred_element_type=jnp.float32,
                precision=prec)
    h = jnp.maximum(h + b1_ref[...], 0.0)       # dropout == identity (eval)
    acc_ref[...] += jnp.dot(h.astype(cdtype), w2_ref[...],
                            preferred_element_type=jnp.float32, precision=prec)

    @pl.when(j == pl.num_programs(1) - 1)
    def _finalize():
        o_ref[...] = (acc_ref[...] + b2_ref[...]).astype(o_ref.dtype)


# ---------------------------------------------------------------------------
# pallas_call wrappers
# ---------------------------------------------------------------------------
def _call_resident(x2d, w1t, b1r, w2t, b2r, *, tm):
    M, D = x2d.shape
    dff = w1t.shape[1]
    w_isz = jnp.dtype(w1t.dtype).itemsize
    io_isz = jnp.dtype(x2d.dtype).itemsize
    vmem_full = pl.BlockSpec(memory_space=pltpu.MemorySpace.VMEM)

    cost = pl.CostEstimate(
        flops=4 * M * D * dff,                       # two matmuls, 2*M*D*dff each
        transcendentals=0,
        bytes_accessed=(2 * M * D * io_isz           # x in + out
                        + 2 * D * dff * w_isz        # W1 + W2 (once per call)
                        + (dff + D) * 4))            # biases

    return pl.pallas_call(
        _ffn_resident_kernel,
        out_shape=jax.ShapeDtypeStruct((M, D), x2d.dtype),
        grid_spec=pltpu.PrefetchScalarGridSpec(
            num_scalar_prefetch=0,
            grid=(M // tm,),
            in_specs=[
                pl.BlockSpec((tm, D), lambda i: (i, 0)),   # x tile (streamed)
                vmem_full,                                 # W1^T (resident)
                vmem_full,                                 # b1
                vmem_full,                                 # W2^T (resident)
                vmem_full,                                 # b2
            ],
            out_specs=pl.BlockSpec((tm, D), lambda i: (i, 0)),
        ),
        compiler_params=pltpu.CompilerParams(
            dimension_semantics=("parallel",),
            vmem_limit_bytes=_vmem_limit(
                _resident_estimate(tm, D, dff, w_isz, io_isz)),
        ),
        cost_estimate=cost,
    )(x2d, w1t, b1r, w2t, b2r)


def _call_dff_tiled(x2d, w1t, b1r, w2t, b2r, *, tm, tkff):
    M, D = x2d.shape
    dff = w1t.shape[1]
    w_isz = jnp.dtype(w1t.dtype).itemsize
    io_isz = jnp.dtype(x2d.dtype).itemsize
    n_row = M // tm

    cost = pl.CostEstimate(
        flops=4 * M * D * dff,
        transcendentals=0,
        bytes_accessed=(2 * M * D * io_isz
                        + n_row * 2 * D * dff * w_isz   # weights re-streamed per row step
                        + (dff + D) * 4))

    return pl.pallas_call(
        _ffn_dff_tiled_kernel,
        out_shape=jax.ShapeDtypeStruct((M, D), x2d.dtype),
        grid_spec=pltpu.PrefetchScalarGridSpec(
            num_scalar_prefetch=0,
            grid=(n_row, dff // tkff),
            in_specs=[
                pl.BlockSpec((tm, D), lambda i, j: (i, 0)),    # x (constant over j)
                pl.BlockSpec((D, tkff), lambda i, j: (0, j)),  # W1^T dff slab
                pl.BlockSpec((1, tkff), lambda i, j: (0, j)),  # b1 slab
                pl.BlockSpec((tkff, D), lambda i, j: (j, 0)),  # W2^T dff slab
                pl.BlockSpec(memory_space=pltpu.MemorySpace.VMEM),   # b2 resident
            ],
            out_specs=pl.BlockSpec((tm, D), lambda i, j: (i, 0)),
            scratch_shapes=[pltpu.VMEM((tm, D), jnp.float32)],
        ),
        compiler_params=pltpu.CompilerParams(
            dimension_semantics=("parallel", "arbitrary"),
            vmem_limit_bytes=_vmem_limit(
                _tiled_estimate(tm, tkff, D, w_isz, io_isz)),
        ),
        cost_estimate=cost,
    )(x2d, w1t, b1r, w2t, b2r)


# ---------------------------------------------------------------------------
# Host-side wrapper
# ---------------------------------------------------------------------------
def prepare_ffn_params(w1, b1, w2, b2, compute_dtype=jnp.bfloat16):
    """One-time prep OUTSIDE the per-call path (do NOT redo every forward).

    Transposes the nn.Linear weights to MXU-friendly layouts and casts them to
    the MXU compute dtype (bf16 by default; accumulation inside the kernel is
    always f32).  Biases stay f32.
        w1: (dff, D) -> (D, dff);   w2: (D, dff) -> (dff, D)
    """
    dff, d_model = w1.shape
    w1t = jnp.asarray(w1.T, dtype=compute_dtype)
    w2t = jnp.asarray(w2.T, dtype=compute_dtype)
    b1r = jnp.asarray(b1, dtype=jnp.float32).reshape(1, dff)
    b2r = jnp.asarray(b2, dtype=jnp.float32).reshape(1, d_model)
    return w1t, b1r, w2t, b2r


def _choose_row_tile(M, tm_req, row_align):
    """Row-tile chooser: clamp to M, prefer >=2 grid steps (v7x has 2 TCs),
    bump to a multiple of 256 when it costs no extra padding (v6e/v7x MXU)."""
    M_al = _round_up(M, row_align)
    n = max(1, _cdiv(M_al, max(tm_req, row_align)))
    if n < 2 and M_al >= 2 * row_align:
        n = 2
    tm = _round_up(_cdiv(M_al, n), row_align)
    if tm % 256 and M_al % (256 * n) == 0:
        tm = _round_up(tm, 256)
    return max(tm, row_align)


def positionwise_feed_forward(x, params, *, tm=512, dff_tile=None):
    """Eval-mode BERT FFN: W2(relu(dropout(W1(x)))), dropout as identity.

    x: (..., D) activations (f32 or bf16; bf16 halves x/out DMA and VMEM).
    params: output of prepare_ffn_params.
    dff_tile: force the dff-tiled accumulator path with this tile size (must
      divide dff and be a multiple of 128); by default it is selected only
      when the fully-resident weights would not fit the chip's VMEM budget.
    """
    w1t, b1r, w2t, b2r = params
    orig_shape = x.shape
    D = orig_shape[-1]
    dff = w1t.shape[1]
    assert w1t.shape == (D, dff) and w2t.shape == (dff, D)
    assert b1r.shape == (1, dff) and b2r.shape == (1, D)

    M = math.prod(orig_shape[:-1])
    x2d = x.reshape(M, D)

    # Sublane alignment of the row tile: 8 for f32, 16 for bf16, 32 for int8.
    itemsize = jnp.dtype(x.dtype).itemsize
    row_align = max(8, 32 // max(itemsize, 1))
    tm_eff = _choose_row_tile(M, tm, row_align)
    M_pad = _round_up(M, tm_eff)
    if M_pad != M:
        x2d = jnp.pad(x2d, ((0, M_pad - M), (0, 0)))

    w_isz = jnp.dtype(w1t.dtype).itemsize
    io_isz = jnp.dtype(x2d.dtype).itemsize
    cap = _vmem_cap_bytes()

    tkff = None
    if dff_tile is not None:
        if dff % dff_tile == 0 and (dff_tile % 128 == 0 or dff_tile == dff):
            tkff = int(dff_tile)
    elif _padded_need(_resident_estimate(tm_eff, D, dff, w_isz, io_isz)) > cap:
        # Resident weights would blow this chip's VMEM budget (e.g. large
        # d_model on v7x's 64 MiB/TC) -> tile the dff axis instead.
        cands = [t for t in range(128, dff, 128) if dff % t == 0]
        for t in cands:
            if _padded_need(_tiled_estimate(tm_eff, t, D, w_isz, io_isz)) <= cap:
                tkff = t              # keep the largest dff tile that fits
        if tkff is None and cands:
            tkff = cands[0]           # best effort

    if tkff is not None:
        out2d = _call_dff_tiled(x2d, w1t, b1r, w2t, b2r, tm=tm_eff, tkff=tkff)
    else:
        out2d = _call_resident(x2d, w1t, b1r, w2t, b2r, tm=tm_eff)

    if M_pad != M:
        out2d = out2d[:M]
    return out2d.reshape(orig_shape)


def init_linear_params(key, out_features, in_features, dtype=jnp.float32):
    """Deterministic init mimicking nn.Linear (uniform +/- 1/sqrt(fan_in))."""
    kw, kb = jax.random.split(key)
    bound = 1.0 / (in_features ** 0.5)
    w = jax.random.uniform(kw, (out_features, in_features), dtype,
                           minval=-bound, maxval=bound)
    b = jax.random.uniform(kb, (out_features,), dtype,
                           minval=-bound, maxval=bound)
    return w, b


if __name__ == "__main__":
    def reference(x, w1, b1, w2, b2):
        hp = jax.lax.Precision.HIGHEST
        h = jnp.maximum(jnp.dot(x, w1.T, precision=hp) + b1, 0.0)
        return jnp.dot(h, w2.T, precision=hp) + b2

    key = jax.random.PRNGKey(0)
    kx, k1, k2, k3, k4, k5 = jax.random.split(key, 6)

    # Small shapes consistent with the module's forward: (B, S, D)
    B, S, D, DFF = 2, 8, 32, 64
    x = jax.random.normal(kx, (B, S, D), dtype=jnp.float32)
    w1, b1 = init_linear_params(k1, DFF, D)   # nn.Linear(dmodel, dff)
    w2, b2 = init_linear_params(k2, D, DFF)   # nn.Linear(dff, dmodel)
    ref = reference(x, w1, b1, w2, b2)

    # 1) f32 compute path (HIGHEST MXU precision inside the kernel).
    params_f32 = prepare_ffn_params(w1, b1, w2, b2, compute_dtype=jnp.float32)
    out_f32 = jax.block_until_ready(positionwise_feed_forward(x, params_f32))
    assert out_f32.shape == (B, S, D)
    assert jnp.allclose(out_f32, ref, atol=1e-4, rtol=1e-4)

    # 2) bf16 activations + bf16 weights (production path), f32 accumulation.
    params_bf16 = prepare_ffn_params(w1, b1, w2, b2, compute_dtype=jnp.bfloat16)
    out_bf16 = jax.block_until_ready(
        positionwise_feed_forward(x.astype(jnp.bfloat16), params_bf16))
    assert out_bf16.shape == (B, S, D) and out_bf16.dtype == jnp.bfloat16
    assert jnp.allclose(out_bf16.astype(jnp.float32), ref, atol=8e-2, rtol=8e-2)

    # 3) Ragged row count (B*S not a multiple of the tile): exercises padding.
    x_odd = jax.random.normal(k3, (3, 5, D), dtype=jnp.float32)
    ref_odd = reference(x_odd, w1, b1, w2, b2)
    out_odd = jax.block_until_ready(positionwise_feed_forward(x_odd, params_f32))
    assert out_odd.shape == (3, 5, D)
    assert jnp.allclose(out_odd, ref_odd, atol=1e-4, rtol=1e-4)

    # 4) dff-tiled accumulator path (what large models hit on v7x's 64 MiB VMEM),
    #    forced here at small shapes via dff_tile=128.
    D2, DFF2 = 128, 256
    x_t = jax.random.normal(k4, (2, 16, D2), dtype=jnp.float32)
    w1_t, b1_t = init_linear_params(k5, DFF2, D2)
    w2_t, b2_t = init_linear_params(k1, D2, DFF2)
    ref_t = reference(x_t, w1_t, b1_t, w2_t, b2_t)
    params_t = prepare_ffn_params(w1_t, b1_t, w2_t, b2_t,
                                  compute_dtype=jnp.float32)
    out_t = jax.block_until_ready(
        positionwise_feed_forward(x_t, params_t, dff_tile=128))
    assert out_t.shape == (2, 16, D2)
    assert jnp.allclose(out_t, ref_t, atol=1e-4, rtol=1e-4)

    print("KERNEL_OK")
</pallas_src>

<mosaic_0001>
module attributes {stable_mosaic.version = 11 : i64} {
  func.func @_ffn_resident_kernel(%arg0: i32, %arg1: memref<8x32xf32, #tpu.memory_space<vmem>>, %arg2: memref<32x64xf32, #tpu.memory_space<vmem>>, %arg3: memref<1x64xf32, #tpu.memory_space<vmem>>, %arg4: memref<64x32xf32, #tpu.memory_space<vmem>>, %arg5: memref<1x32xf32, #tpu.memory_space<vmem>>, %arg6: memref<8x32xf32, #tpu.memory_space<vmem>>) attributes {dimension_semantics = [#tpu.dimension_semantics<parallel>], iteration_bounds = array<i64: 2>, scalar_prefetch = 0 : i64, scratch_operands = 0 : i64, tpu.core_type = #tpu.core_type<tc>, window_params = [{transform_indices = @transform_0, window_bounds = array<i64: 8, 32>}, {pipeline_mode = #tpu.pipeline_mode<synchronous>, transform_indices = @transform_1, window_bounds = array<i64: 32, 64>}, {pipeline_mode = #tpu.pipeline_mode<synchronous>, transform_indices = @transform_2, window_bounds = array<i64: 1, 64>}, {pipeline_mode = #tpu.pipeline_mode<synchronous>, transform_indices = @transform_3, window_bounds = array<i64: 64, 32>}, {pipeline_mode = #tpu.pipeline_mode<synchronous>, transform_indices = @transform_4, window_bounds = array<i64: 1, 32>}, {transform_indices = @transform_5, window_bounds = array<i64: 8, 32>}]} {
    %c0 = arith.constant 0 : index
    %c0_0 = arith.constant 0 : index
    %0 = vector.load %arg1[%c0, %c0_0] : memref<8x32xf32, #tpu.memory_space<vmem>>, vector<8x32xf32>
    %c0_1 = arith.constant 0 : index
    %c0_2 = arith.constant 0 : index
    %1 = vector.load %arg2[%c0_1, %c0_2] : memref<32x64xf32, #tpu.memory_space<vmem>>, vector<32x64xf32>
    %cst = arith.constant dense<0.000000e+00> : vector<8x64xf32>
    %2 = tpu.matmul %0, %1, %cst {dimension_numbers = #tpu.dot_dimension_numbers<[1], [0], [0], [1], [0, 0, 1, 1], [], []>, precision = #tpu.contract_precision<fp32>} : vector<8x32xf32>, vector<32x64xf32>, vector<8x64xf32> -> vector<8x64xf32>
    %c0_3 = arith.constant 0 : index
    %c0_4 = arith.constant 0 : index
    %3 = vector.load %arg3[%c0_3, %c0_4] : memref<1x64xf32, #tpu.memory_space<vmem>>, vector<1x64xf32>
    %4 = vector.broadcast %3 : vector<1x64xf32> to vector<8x64xf32>
    %5 = arith.addf %2, %4 : vector<8x64xf32>
    %cst_5 = arith.constant 0.000000e+00 : f32
    %6 = vector.broadcast %cst_5 : f32 to vector<8x64xf32>
    %7 = arith.maximumf %5, %6 : vector<8x64xf32>
    %c0_6 = arith.constant 0 : index
    %c0_7 = arith.constant 0 : index
    %8 = vector.load %arg4[%c0_6, %c0_7] : memref<64x32xf32, #tpu.memory_space<vmem>>, vector<64x32xf32>
    %cst_8 = arith.constant dense<0.000000e+00> : vector<8x32xf32>
    %9 = tpu.matmul %7, %8, %cst_8 {dimension_numbers = #tpu.dot_dimension_numbers<[1], [0], [0], [1], [0, 0, 1, 1], [], []>, precision = #tpu.contract_precision<fp32>} : vector<8x64xf32>, vector<64x32xf32>, vector<8x32xf32> -> vector<8x32xf32>
    %c0_9 = arith.constant 0 : index
    %c0_10 = arith.constant 0 : index
    %10 = vector.load %arg5[%c0_9, %c0_10] : memref<1x32xf32, #tpu.memory_space<vmem>>, vector<1x32xf32>
    %11 = vector.broadcast %10 : vector<1x32xf32> to vector<8x32xf32>
    %12 = arith.addf %9, %11 : vector<8x32xf32>
    %c0_11 = arith.constant 0 : index
    %c0_12 = arith.constant 0 : index
    %13 = vector.load %arg6[%c0_11, %c0_12] : memref<8x32xf32, #tpu.memory_space<vmem>>, vector<8x32xf32>
    tpu.vector_store %arg6[%c0_11, %c0_12], %12 {strides = array<i32>} : memref<8x32xf32, #tpu.memory_space<vmem>>, vector<8x32xf32>,
    return
  }
  func.func @transform_0(%arg0: i32) -> (i32, i32) {
    %c0_i32 = arith.constant 0 : i32
    %c0_i32_0 = arith.constant 0 : i32
    return %arg0, %c0_i32 : i32, i32
  }
  func.func @transform_1(%arg0: i32) -> (i32, i32) {
    %c0_i32 = arith.constant 0 : i32
    %c0_i32_0 = arith.constant 0 : i32
    %c0_i32_1 = arith.constant 0 : i32
    return %c0_i32, %c0_i32_0 : i32, i32
  }
  func.func @transform_2(%arg0: i32) -> (i32, i32) {
    %c0_i32 = arith.constant 0 : i32
    %c0_i32_0 = arith.constant 0 : i32
    %c0_i32_1 = arith.constant 0 : i32
    return %c0_i32, %c0_i32_0 : i32, i32
  }
  func.func @transform_3(%arg0: i32) -> (i32, i32) {
    %c0_i32 = arith.constant 0 : i32
    %c0_i32_0 = arith.constant 0 : i32
    %c0_i32_1 = arith.constant 0 : i32
    return %c0_i32, %c0_i32_0 : i32, i32
  }
  func.func @transform_4(%arg0: i32) -> (i32, i32) {
    %c0_i32 = arith.constant 0 : i32
    %c0_i32_0 = arith.constant 0 : i32
    %c0_i32_1 = arith.constant 0 : i32
    return %c0_i32, %c0_i32_0 : i32, i32
  }
  func.func @transform_5(%arg0: i32) -> (i32, i32) {
    %c0_i32 = arith.constant 0 : i32
    %c0_i32_0 = arith.constant 0 : i32
    return %arg0, %c0_i32 : i32, i32
  }
}

</mosaic_0001>

<llo_original>
// kernel: tpu_custom_call.1
$region0: #{tpu_custom_call.1}
  #allocation0 [shape = 'u32[]', space=smem, size = 0x4, offset = 0x4, fixed_abs, tag = 'smem constant byte address 0x4 - core index']
  #allocation1 [shape = 'u32[72,128]{1,0:T(1,128)}', space=vmem, size = 0x9000, scoped, tag = 'internal scratch']
  %s0 = inlined_call_operand.vmem [shape: f32[16,32], index: 0, kind: input, shape index: {}]
  %s1 = inlined_call_operand.vmem [shape: f32[32,64], index: 1, kind: input, shape index: {}]
  %s2 = inlined_call_operand.vmem [shape: f32[1,64], index: 2, kind: input, shape index: {}]
  %s3 = inlined_call_operand.vmem [shape: f32[64,32], index: 3, kind: input, shape index: {}]
  %s4 = inlined_call_operand.vmem [shape: f32[1,32], index: 4, kind: input, shape index: {}]
  %s5 = inlined_call_operand.hbm [shape: f32[16,32], index: 5, kind: output, shape index: {}]
  %s6 = sld [smem:[#allocation0]]
  $region53: #{tpu_custom_call.1} parent=0
    _
  %s8 = ssub.s32 1, %s6
  %s9 = scalar_select 0, %s8, %s6
  $region1: #{tpu_custom_call.1} parent=0
    #allocation2 [shape = 'u8[8192]{0}', space=vmem, size = 0x2000, scoped, tag = 'output window, operand 0']
    #allocation3 [shape = 's32[2]{0}', space=sflag, size = 0x8, scoped, tag = 'scoped memory for tpu_custom_call.1']
    %10 = vsyncpa [#allocation3], 0
    %s11 = scalar_lea.sflag [#allocation3], 1
    %12 = vsyncpa %s11, 0
    loop: start=0, step=1, limit=4
    $region2: #{tpu_custom_call.1} parent=1 // loop_pre_header
      _
    $region3: #{tpu_custom_call.1} parent=1 // loop_header
      %s14 = sphi 0, %s18
      %p15 = scmp.ge.s32.totalorder %s14, 4
      %s24 = sphi 0, %s26
      %s27 = sphi 0, %s24
      %s28 = sphi 0, %s27
      %s44 = sphi 0, %s28
      %s48 = sphi 0, %s48
      %s50 = sphi 0, %s48
      %s51 = sphi 0, %s50
      %s65 = sphi 0, %s51
      %s69 = sphi 0, %s69
      %s71 = sphi 0, %s69
      %s72 = sphi 0, %s71
      %s86 = sphi 0, %s72
      %s90 = sphi 0, %s90
      %s92 = sphi 0, %s90
      %s93 = sphi 0, %s92
      %s107 = sphi 0, %s93
      %s111 = sphi 0, %s111
      %s113 = sphi 0, %s111
      %s114 = sphi 0, %s113
      %s128 = sphi 0, %s114
      %s134 = sphi 0, %s136
      %s137 = sphi 0, %s134
      %s138 = sphi 0, %s137
      %s154 = sphi 0, %s138
    $region4: #{tpu_custom_call.1} parent=1 // loop_header_branch
      %17 = sbr.rel (%p15) target = $region8
    $region5: #{tpu_custom_call.1} parent=1 // loop_body
      %s19 = ssub.s32 %s14, 1
      %s20 = ssub.s32 %s14, 2
      %s21 = sadd.s32 %s14, 1
      %s22 = ssub.s32 %s14, %s21
      %p23 = scmp.eq.s32.totalorder %s22, 0
      %s25 = sadd.s32 %s24, 1
      %s26 = scalar_select %p23, %s24, %s25
      %p29 = pneg %p23
      %p30 = scmp.eq.s32.totalorder %s14, 1
      %p31 = por %p29, %p30
      %p32 = scmp.ne.s32.totalorder %s24, %s27
      %p33 = scmp.eq.s32.totalorder %s14, 0
      %p34 = por %p32, %p33
      %p35 = scmp.ne.s32.totalorder %s24, %s27
      %p36 = scmp.eq.s32.totalorder %s19, 1
      %p37 = por %p35, %p36
      %p38 = scmp.ne.s32.totalorder %s27, %s28
      %p39 = scmp.eq.s32.totalorder %s19, 0
      %p40 = por %p38, %p39
      %p41 = scmp.ne.s32.totalorder %s27, %s28
      %p42 = scmp.eq.s32.totalorder %s20, 1
      %p43 = por %p41, %p42
      %p45 = scmp.ne.s32.totalorder %s28, %s44
      %p46 = scmp.eq.s32.totalorder %s20, 0
      %p47 = por %p45, %p46
      %s49 = sadd.s32 %s48, 1
      %p52 = scmp.eq.s32.totalorder %s14, 1
      %p53 = scmp.ne.s32.totalorder %s48, %s50
      %p54 = scmp.eq.s32.totalorder %s14, 0
      %p55 = por %p53, %p54
      %p56 = scmp.ne.s32.totalorder %s48, %s50
      %p57 = scmp.eq.s32.totalorder %s19, 1
      %p58 = por %p56, %p57
      %p59 = scmp.ne.s32.totalorder %s50, %s51
      %p60 = scmp.eq.s32.totalorder %s19, 0
      %p61 = por %p59, %p60
      %p62 = scmp.ne.s32.totalorder %s50, %s51
      %p63 = scmp.eq.s32.totalorder %s20, 1
      %p64 = por %p62, %p63
      %p66 = scmp.ne.s32.totalorder %s51, %s65
      %p67 = scmp.eq.s32.totalorder %s20, 0
      %p68 = por %p66, %p67
      %s70 = sadd.s32 %s69, 1
      %p73 = scmp.eq.s32.totalorder %s14, 1
      %p74 = scmp.ne.s32.totalorder %s69, %s71
      %p75 = scmp.eq.s32.totalorder %s14, 0
      %p76 = por %p74, %p75
      %p77 = scmp.ne.s32.totalorder %s69, %s71
      %p78 = scmp.eq.s32.totalorder %s19, 1
      %p79 = por %p77, %p78
      %p80 = scmp.ne.s32.totalorder %s71, %s72
      %p81 = scmp.eq.s32.totalorder %s19, 0
      %p82 = por %p80, %p81
      %p83 = scmp.ne.s32.totalorder %s71, %s72
      %p84 = scmp.eq.s32.totalorder %s20, 1
      %p85 = por %p83, %p84
      %p87 = scmp.ne.s32.totalorder %s72, %s86
      %p88 = scmp.eq.s32.totalorder %s20, 0
      %p89 = por %p87, %p88
      %s91 = sadd.s32 %s90, 1
      %p94 = scmp.eq.s32.totalorder %s14, 1
      %p95 = scmp.ne.s32.totalorder %s90, %s92
      %p96 = scmp.eq.s32.totalorder %s14, 0
      %p97 = por %p95, %p96
      %p98 = scmp.ne.s32.totalorder %s90, %s92
      %p99 = scmp.eq.s32.totalorder %s19, 1
      %p100 = por %p98, %p99
      %p101 = scmp.ne.s32.totalorder %s92, %s93
      %p102 = scmp.eq.s32.totalorder %s19, 0
      %p103 = por %p101, %p102
      %p104 = scmp.ne.s32.totalorder %s92, %s93
      %p105 = scmp.eq.s32.totalorder %s20, 1
      %p106 = por %p104, %p105
      %p108 = scmp.ne.s32.totalorder %s93, %s107
      %p109 = scmp.eq.s32.totalorder %s20, 0
      %p110 = por %p108, %p109
      %s112 = sadd.s32 %s111, 1
      %p115 = scmp.eq.s32.totalorder %s14, 1
      %p116 = scmp.ne.s32.totalorder %s111, %s113
      %p117 = scmp.eq.s32.totalorder %s14, 0
      %p118 = por %p116, %p117
      %p119 = scmp.ne.s32.totalorder %s111, %s113
      %p120 = scmp.eq.s32.totalorder %s19, 1
      %p121 = por %p119, %p120
      %p122 = scmp.ne.s32.totalorder %s113, %s114
      %p123 = scmp.eq.s32.totalorder %s19, 0
      %p124 = por %p122, %p123
      %p125 = scmp.ne.s32.totalorder %s113, %s114
      %p126 = scmp.eq.s32.totalorder %s20, 1
      %p127 = por %p125, %p126
      %p129 = scmp.ne.s32.totalorder %s114, %s128
      %p130 = scmp.eq.s32.totalorder %s20, 0
      %p131 = por %p129, %p130
      %s132 = ssub.s32 %s14, %s21
      %p133 = scmp.eq.s32.totalorder %s132, 0
      %s135 = sadd.s32 %s134, 1
      %s136 = scalar_select %p133, %s134, %s135
      %p139 = pneg %p133
      %p140 = scmp.eq.s32.totalorder %s14, 1
      %p141 = por %p139, %p140
      %p142 = scmp.ne.s32.totalorder %s134, %s137
      %p143 = scmp.eq.s32.totalorder %s14, 0
      %p144 = por %p142, %p143
      %p145 = scmp.ne.s32.totalorder %s134, %s137
      %p146 = scmp.eq.s32.totalorder %s19, 1
      %p147 = por %p145, %p146
      %p148 = scmp.ne.s32.totalorder %s137, %s138
      %p149 = scmp.eq.s32.totalorder %s19, 0
      %p150 = por %p148, %p149
      %p151 = scmp.ne.s32.totalorder %s137, %s138
      %p152 = scmp.eq.s32.totalorder %s20, 1
      %p153 = por %p151, %p152
      %p155 = scmp.ne.s32.totalorder %s138, %s154
      %p156 = scmp.eq.s32.totalorder %s20, 0
      %p157 = por %p155, %p156
      %p158 = scmp.le.s32.totalorder 1, %s14
      %p159 = scmp.lt.s32.totalorder %s14, 3
      %p160 = pnand %p158, %p159
      %p161 = pneg %p160
      // Predicated region
      $region9: #{tpu_custom_call.1} parent=5 // pred_check
        _
      $region10: #{tpu_custom_call.1} parent=5 // pred_check_branch
        %163 = sbr.rel (%p160) target = $region12
      $region11: #{tpu_custom_call.1} parent=5 // pred_region
        %s164 = ssub.s32 %s14, 1
        // Predicated region
        $region13: #{tpu_custom_call.1} parent=11 // pred_check
          %p165 = pneg %p61
        $region14: #{tpu_custom_call.1} parent=11 // pred_check_branch
          %167 = sbr.rel (%p165) target = $region16
        $region15: #{tpu_custom_call.1} parent=11 // pred_region
          _
        $region16: #{tpu_custom_call.1} parent=11 // pred_fallthru
          _
        // Predicated region
        $region17: #{tpu_custom_call.1} parent=11 // pred_check
          %p168 = pneg %p82
        $region18: #{tpu_custom_call.1} parent=11 // pred_check_branch
          %170 = sbr.rel (%p168) target = $region20
        $region19: #{tpu_custom_call.1} parent=11 // pred_region
          _
        $region20: #{tpu_custom_call.1} parent=11 // pred_fallthru
          _
        // Predicated region
        $region21: #{tpu_custom_call.1} parent=11 // pred_check
          %p171 = pneg %p103
        $region22: #{tpu_custom_call.1} parent=11 // pred_check_branch
          %173 = sbr.rel (%p171) target = $region24
        $region23: #{tpu_custom_call.1} parent=11 // pred_region
          _
        $region24: #{tpu_custom_call.1} parent=11 // pred_fallthru
          _
        // Predicated region
        $region25: #{tpu_custom_call.1} parent=11 // pred_check
          %p174 = pneg %p124
        $region26: #{tpu_custom_call.1} parent=11 // pred_check_branch
          %176 = sbr.rel (%p174) target = $region28
        $region27: #{tpu_custom_call.1} parent=11 // pred_region
          _
        $region28: #{tpu_custom_call.1} parent=11 // pred_fallthru
          _
      $region12: #{tpu_custom_call.1} parent=5 // pred_fallthru
        _
      %p177 = scmp.lt.s32.totalorder %s14, 2
      // Predicated region
      $region29: #{tpu_custom_call.1} parent=5 // pred_check
        %p178 = pneg %p177
      $region30: #{tpu_custom_call.1} parent=5 // pred_check_branch
        %180 = sbr.rel (%p178) target = $region32
      $region31: #{tpu_custom_call.1} parent=5 // pred_region
        // Predicated region
        $region33: #{tpu_custom_call.1} parent=31 // pred_check
          %p181 = pneg %p34
        $region34: #{tpu_custom_call.1} parent=31 // pred_check_branch
          %183 = sbr.rel (%p181) target = $region36
        $region35: #{tpu_custom_call.1} parent=31 // pred_region
          %p184 = scmp.lt.s32.totalorder %s14, 1
          %s185 = scalar_select %p184, %s14, 1
          %s186 = smul.addr %s185, 8
          %s187 = scalar_lea.vmem %s0, %s186
        $region36: #{tpu_custom_call.1} parent=31 // pred_fallthru
          _
      $region32: #{tpu_custom_call.1} parent=5 // pred_fallthru
        _
      %p188 = scmp.le.s32.totalorder 1, %s14
      %p189 = scmp.lt.s32.totalorder %s14, 3
      %p190 = pnand %p188, %p189
      %p191 = pneg %p190
      // Predicated region
      $region37: #{tpu_custom_call.1} parent=5 // pred_check
        _
      $region38: #{tpu_custom_call.1} parent=5 // pred_check_branch
        %193 = sbr.rel (%p190) target = $region40
      $region39: #{tpu_custom_call.1} parent=5 // pred_region
        %s194 = ssub.s32 %s14, 1
        %p195 = scmp.lt.s32.totalorder %s19, 1
        %s196 = scalar_select %p195, %s19, 1
        %s197 = smul.addr %s196, 8
        %s198 = scalar_lea.vmem %s0, %s197
        %p199 = pneg %p40
        %p200 = pneg %p37
        %p201 = pneg %p61
        %p202 = pneg %p58
        %p203 = pneg %p82
        %p204 = pneg %p79
        %p205 = pneg %p103
        %p206 = pneg %p100
        %p207 = pneg %p124
        %p208 = pneg %p121
        %p209 = pneg %p150
        %p210 = pneg %p147
        %s211 = sand.u32 %s137, 1
        %s212 = scalar_lea.sflag [#allocation3], %s211
        %s213 = sand.u32 %s137, 1
        %s214 = smul.addr %s213, 8
        %s215 = scalar_lea.vmem [#allocation2], %s214
        %p216 = scmp.lt.s32.totalorder %s19, 1
        %s217 = scalar_select %p216, %s19, 1
        %s218 = smul.addr %s217, 8
        %s219 = scalar_lea.vmem %s0, %s218
        %v220 = vld [vmem:[%s219] sm:$0xff]
        %v221 = vld [vmem:[%s1] sm:$0xff]
        %v222 = vld [vmem:[%s1 + $0x8] sm:$0xff]
        %v223 = vld [vmem:[%s1 + $0x10] sm:$0xff]
        %v224 = vld [vmem:[%s1 + $0x18] sm:$0xff]
        %v225 = vld [vmem:[%s2] sm:$0x1]
        %v227 = vperm.slane %v225, 0
        %vm229 = vcmask 261120
        %v231 = vsel %vm229, %v220, 0
        %233 = vmatpush.msra.mxu0 0.0
        %234 = vmatpush.msra.mxu0 0.0
        %235 = vmatpush.msra.mxu0 0.0
        %236 = vmatpush.msra.mxu0 0.0
        %237 = vmatpush.msra.mxu0 0.0
        %238 = vmatpush.msra.mxu0 0.0
        %239 = vmatpush.msra.mxu0 0.0
        %240 = vmatpush.msra.mxu0 0.0
        %241 = vmatpush.msra.mxu0 0.0
        %242 = vmatpush.msra.mxu0 0.0
        %243 = vmatpush.msra.mxu0 0.0
        %244 = vmatpush.msra.mxu0 0.0
        %v245 = vand.u32 %v224, 4294901760
        %246 = vmatpush.msra.mxu0 %v245
        %v247 = vand.u32 %v223, 4294901760
        %248 = vmatpush.msra.mxu0 %v247
        %v249 = vand.u32 %v222, 4294901760
        %250 = vmatpush.msra.mxu0 %v249
        %v251 = vand.u32 %v221, 4294901760
        %252 = vmatpush.msra.mxu0 %v251
        %v253 = vand.u32 %v231, 4294901760
        %v254 = vsub.f32 %v231, %v253
        %v255 = vand.u32 %v254, 4294901760
        %v256 = vsub.f32 %v254, %v255
        %v257 = vand.u32 %v256, 4294901760
        %258 = vmatmul.f32.gmra.mxu0 %v257
        %v259 = vpop.f32.mrf.mxu0
        %v260 = vadd.f32 %v227, %v259
        %261 = vdwg.mxu0
        %262 = vmatpush.msra.mxu0 0.0
        %263 = vmatpush.msra.mxu0 0.0
        %264 = vmatpush.msra.mxu0 0.0
        %265 = vmatpush.msra.mxu0 0.0
        %266 = vmatpush.msra.mxu0 0.0
        %267 = vmatpush.msra.mxu0 0.0
        %268 = vmatpush.msra.mxu0 0.0
        %269 = vmatpush.msra.mxu0 0.0
        %270 = vmatpush.msra.mxu0 0.0
        %271 = vmatpush.msra.mxu0 0.0
        %272 = vmatpush.msra.mxu0 0.0
        %273 = vmatpush.msra.mxu0 0.0
        %v274 = vand.u32 %v224, 4294901760
        %v275 = vsub.f32 %v224, %v274
        %v276 = vand.u32 %v275, 4294901760
        %v277 = vsub.f32 %v275, %v276
        %v278 = vand.u32 %v277, 4294901760
        %279 = vmatpush.msra.mxu0 %v278
        %v280 = vand.u32 %v223, 4294901760
        %v281 = vsub.f32 %v223, %v280
        %v282 = vand.u32 %v281, 4294901760
        %v283 = vsub.f32 %v281, %v282
        %v284 = vand.u32 %v283, 4294901760
        %285 = vmatpush.msra.mxu0 %v284
        %v286 = vand.u32 %v222, 4294901760
        %v287 = vsub.f32 %v222, %v286
        %v288 = vand.u32 %v287, 4294901760
        %v289 = vsub.f32 %v287, %v288
        %v290 = vand.u32 %v289, 4294901760
        %291 = vmatpush.msra.mxu0 %v290
        %v292 = vand.u32 %v221, 4294901760
        %v293 = vsub.f32 %v221, %v292
        %v294 = vand.u32 %v293, 4294901760
        %v295 = vsub.f32 %v293, %v294
        %v296 = vand.u32 %v295, 4294901760
        %297 = vmatpush.msra.mxu0 %v296
        %v298 = vand.u32 %v231, 4294901760
        %299 = vmatmul.f32.gmra.mxu0 %v298
        %v300 = vpop.f32.mrf.mxu0
        %v301 = vadd.f32 %v260, %v300
        %302 = vdwg.mxu0
        %303 = vmatpush.msra.mxu0 0.0
        %304 = vmatpush.msra.mxu0 0.0
        %305 = vmatpush.msra.mxu0 0.0
        %306 = vmatpush.msra.mxu0 0.0
        %307 = vmatpush.msra.mxu0 0.0
        %308 = vmatpush.msra.mxu0 0.0
        %309 = vmatpush.msra.mxu0 0.0
        %310 = vmatpush.msra.mxu0 0.0
        %311 = vmatpush.msra.mxu0 0.0
        %312 = vmatpush.msra.mxu0 0.0
        %313 = vmatpush.msra.mxu0 0.0
        %314 = vmatpush.msra.mxu0 0.0
        %v315 = vand.u32 %v224, 4294901760
        %v316 = vsub.f32 %v224, %v315
        %317 = vmatpush.msra.mxu0 %v316
        %v318 = vand.u32 %v223, 4294901760
        %v319 = vsub.f32 %v223, %v318
        %320 = vmatpush.msra.mxu0 %v319
        %v321 = vand.u32 %v222, 4294901760
        %v322 = vsub.f32 %v222, %v321
        %323 = vmatpush.msra.mxu0 %v322
        %v324 = vand.u32 %v221, 4294901760
        %v325 = vsub.f32 %v221, %v324
        %326 = vmatpush.msra.mxu0 %v325
        %v327 = vand.u32 %v231, 4294901760
        %v328 = vsub.f32 %v231, %v327
        %329 = vmatmul.f32.gmra.mxu0 %v328
        %v330 = vpop.f32.mrf.mxu0
        %v331 = vadd.f32 %v301, %v330
        %332 = vdwg.mxu0
        %333 = vmatpush.msra.mxu0 0.0
        %334 = vmatpush.msra.mxu0 0.0
        %335 = vmatpush.msra.mxu0 0.0
        %336 = vmatpush.msra.mxu0 0.0
        %337 = vmatpush.msra.mxu0 0.0
        %338 = vmatpush.msra.mxu0 0.0
        %339 = vmatpush.msra.mxu0 0.0
        %340 = vmatpush.msra.mxu0 0.0
        %341 = vmatpush.msra.mxu0 0.0
        %342 = vmatpush.msra.mxu0 0.0
        %343 = vmatpush.msra.mxu0 0.0
        %344 = vmatpush.msra.mxu0 0.0
        %v345 = vand.u32 %v224, 4294901760
        %346 = vmatpush.msra.mxu0 %v345
        %v347 = vand.u32 %v223, 4294901760
        %348 = vmatpush.msra.mxu0 %v347
        %v349 = vand.u32 %v222, 4294901760
        %350 = vmatpush.msra.mxu0 %v349
        %v351 = vand.u32 %v221, 4294901760
        %352 = vmatpush.msra.mxu0 %v351
        %v353 = vand.u32 %v231, 4294901760
        %v354 = vsub.f32 %v231, %v353
        %v355 = vand.u32 %v354, 4294901760
        %356 = vmatmul.f32.gmra.mxu0 %v355
        %v357 = vpop.f32.mrf.mxu0
        %v358 = vadd.f32 %v331, %v357
        %359 = vdwg.mxu0
        %360 = vmatpush.msra.mxu0 0.0
        %361 = vmatpush.msra.mxu0 0.0
        %362 = vmatpush.msra.mxu0 0.0
        %363 = vmatpush.msra.mxu0 0.0
        %364 = vmatpush.msra.mxu0 0.0
        %365 = vmatpush.msra.mxu0 0.0
        %366 = vmatpush.msra.mxu0 0.0
        %367 = vmatpush.msra.mxu0 0.0
        %368 = vmatpush.msra.mxu0 0.0
        %369 = vmatpush.msra.mxu0 0.0
        %370 = vmatpush.msra.mxu0 0.0
        %371 = vmatpush.msra.mxu0 0.0
        %v372 = vand.u32 %v224, 4294901760
        %v373 = vsub.f32 %v224, %v372
        %v374 = vand.u32 %v373, 4294901760
        %375 = vmatpush.msra.mxu0 %v374
        %v376 = vand.u32 %v223, 4294901760
        %v377 = vsub.f32 %v223, %v376
        %v378 = vand.u32 %v377, 4294901760
        %379 = vmatpush.msra.mxu0 %v378
        %v380 = vand.u32 %v222, 4294901760
        %v381 = vsub.f32 %v222, %v380
        %v382 = vand.u32 %v381, 4294901760
        %383 = vmatpush.msra.mxu0 %v382
        %v384 = vand.u32 %v221, 4294901760
        %v385 = vsub.f32 %v221, %v384
        %v386 = vand.u32 %v385, 4294901760
        %387 = vmatpush.msra.mxu0 %v386
        %v388 = vand.u32 %v231, 4294901760
        %389 = vmatmul.f32.gmra.mxu0 %v388
        %v390 = vpop.f32.mrf.mxu0
        %v391 = vadd.f32 %v358, %v390
        %392 = vdwg.mxu0
        %393 = vmatpush.msra.mxu0 0.0
        %394 = vmatpush.msra.mxu0 0.0
        %395 = vmatpush.msra.mxu0 0.0
        %396 = vmatpush.msra.mxu0 0.0
        %397 = vmatpush.msra.mxu0 0.0
        %398 = vmatpush.msra.mxu0 0.0
        %399 = vmatpush.msra.mxu0 0.0
        %400 = vmatpush.msra.mxu0 0.0
        %401 = vmatpush.msra.mxu0 0.0
        %402 = vmatpush.msra.mxu0 0.0
        %403 = vmatpush.msra.mxu0 0.0
        %404 = vmatpush.msra.mxu0 0.0
        %v405 = vand.u32 %v224, 4294901760
        %406 = vmatpush.msra.mxu0 %v405
        %v407 = vand.u32 %v223, 4294901760
        %408 = vmatpush.msra.mxu0 %v407
        %v409 = vand.u32 %v222, 4294901760
        %410 = vmatpush.msra.mxu0 %v409
        %v411 = vand.u32 %v221, 4294901760
        %412 = vmatpush.msra.mxu0 %v411
        %v413 = vand.u32 %v231, 4294901760
        %414 = vmatmul.f32.gmra.mxu0 %v413
        %v415 = vpop.f32.mrf.mxu0
        %v416 = vadd.f32 %v391, %v415
        %417 = vdwg.mxu0
        %v418 = vmax.f32 %v416, 0.0
        %v419 = vld [vmem:[%s3] sm:$0xff]
        %v420 = vld [vmem:[%s3 + $0x8] sm:$0xff]
        %v421 = vld [vmem:[%s3 + $0x10] sm:$0xff]
        %v422 = vld [vmem:[%s3 + $0x18] sm:$0xff]
        %v423 = vld [vmem:[%s3 + $0x20] sm:$0xff]
        %v424 = vld [vmem:[%s3 + $0x28] sm:$0xff]
        %v425 = vld [vmem:[%s3 + $0x30] sm:$0xff]
        %v426 = vld [vmem:[%s3 + $0x38] sm:$0xff]
        %v427 = vld [vmem:[%s4] sm:$0x1]
        %v429 = vperm.slane %v427, 0
        %vm431 = vcmask 523264
        %v433 = vsel %vm431, %v418, 0
        %435 = vmatpush.msra.mxu0 0.0
        %436 = vmatpush.msra.mxu0 0.0
        %437 = vmatpush.msra.mxu0 0.0
        %438 = vmatpush.msra.mxu0 0.0
        %439 = vmatpush.msra.mxu0 0.0
        %440 = vmatpush.msra.mxu0 0.0
        %441 = vmatpush.msra.mxu0 0.0
        %442 = vmatpush.msra.mxu0 0.0
        %v443 = vand.u32 %v426, 4294901760
        %444 = vmatpush.msra.mxu0 %v443
        %v445 = vand.u32 %v425, 4294901760
        %446 = vmatpush.msra.mxu0 %v445
        %v447 = vand.u32 %v424, 4294901760
        %448 = vmatpush.msra.mxu0 %v447
        %v449 = vand.u32 %v423, 4294901760
        %450 = vmatpush.msra.mxu0 %v449
        %v451 = vand.u32 %v422, 4294901760
        %452 = vmatpush.msra.mxu0 %v451
        %v453 = vand.u32 %v421, 4294901760
        %454 = vmatpush.msra.mxu0 %v453
        %v455 = vand.u32 %v420, 4294901760
        %456 = vmatpush.msra.mxu0 %v455
        %v457 = vand.u32 %v419, 4294901760
        %458 = vmatpush.msra.mxu0 %v457
        %v459 = vand.u32 %v433, 4294901760
        %v460 = vsub.f32 %v433, %v459
        %v461 = vand.u32 %v460, 4294901760
        %v462 = vsub.f32 %v460, %v461
        %v463 = vand.u32 %v462, 4294901760
        %464 = vmatmul.f32.gmra.mxu0 %v463
        %v465 = vpop.f32.mrf.mxu0
        %v466 = vadd.f32 %v429, %v465
        %467 = vdwg.mxu0
        %468 = vmatpush.msra.mxu0 0.0
        %469 = vmatpush.msra.mxu0 0.0
        %470 = vmatpush.msra.mxu0 0.0
        %471 = vmatpush.msra.mxu0 0.0
        %472 = vmatpush.msra.mxu0 0.0
        %473 = vmatpush.msra.mxu0 0.0
        %474 = vmatpush.msra.mxu0 0.0
        %475 = vmatpush.msra.mxu0 0.0
        %v476 = vand.u32 %v426, 4294901760
        %v477 = vsub.f32 %v426, %v476
        %v478 = vand.u32 %v477, 4294901760
        %v479 = vsub.f32 %v477, %v478
        %v480 = vand.u32 %v479, 4294901760
        %481 = vmatpush.msra.mxu0 %v480
        %v482 = vand.u32 %v425, 4294901760
        %v483 = vsub.f32 %v425, %v482
        %v484 = vand.u32 %v483, 4294901760
        %v485 = vsub.f32 %v483, %v484
        %v486 = vand.u32 %v485, 4294901760
        %487 = vmatpush.msra.mxu0 %v486
        %v488 = vand.u32 %v424, 4294901760
        %v489 = vsub.f32 %v424, %v488
        %v490 = vand.u32 %v489, 4294901760
        %v491 = vsub.f32 %v489, %v490
        %v492 = vand.u32 %v491, 4294901760
        %493 = vmatpush.msra.mxu0 %v492
        %v494 = vand.u32 %v423, 4294901760
        %v495 = vsub.f32 %v423, %v494
        %v496 = vand.u32 %v495, 4294901760
        %v497 = vsub.f32 %v495, %v496
        %v498 = vand.u32 %v497, 4294901760
        %499 = vmatpush.msra.mxu0 %v498
        %v500 = vand.u32 %v422, 4294901760
        %v501 = vsub.f32 %v422, %v500
        %v502 = vand.u32 %v501, 4294901760
        %v503 = vsub.f32 %v501, %v502
        %v504 = vand.u32 %v503, 4294901760
        %505 = vmatpush.msra.mxu0 %v504
        %v506 = vand.u32 %v421, 4294901760
        %v507 = vsub.f32 %v421, %v506
        %v508 = vand.u32 %v507, 4294901760
        %v509 = vsub.f32 %v507, %v508
        %v510 = vand.u32 %v509, 4294901760
        %511 = vmatpush.msra.mxu0 %v510
        %v512 = vand.u32 %v420, 4294901760
        %v513 = vsub.f32 %v420, %v512
        %v514 = vand.u32 %v513, 4294901760
        %v515 = vsub.f32 %v513, %v514
        %v516 = vand.u32 %v515, 4294901760
        %517 = vmatpush.msra.mxu0 %v516
        %v518 = vand.u32 %v419, 4294901760
        %v519 = vsub.f32 %v419, %v518
        %v520 = vand.u32 %v519, 4294901760
        %v521 = vsub.f32 %v519, %v520
        %v522 = vand.u32 %v521, 4294901760
        %523 = vmatpush.msra.mxu0 %v522
        %v524 = vand.u32 %v433, 4294901760
        %525 = vmatmul.f32.gmra.mxu0 %v524
        %v526 = vpop.f32.mrf.mxu0
        %v527 = vadd.f32 %v466, %v526
        %528 = vdwg.mxu0
        %529 = vmatpush.msra.mxu0 0.0
        %530 = vmatpush.msra.mxu0 0.0
        %531 = vmatpush.msra.mxu0 0.0
        %532 = vmatpush.msra.mxu0 0.0
        %533 = vmatpush.msra.mxu0 0.0
        %534 = vmatpush.msra.mxu0 0.0
        %535 = vmatpush.msra.mxu0 0.0
        %536 = vmatpush.msra.mxu0 0.0
        %v537 = vand.u32 %v426, 4294901760
        %v538 = vsub.f32 %v426, %v537
        %539 = vmatpush.msra.mxu0 %v538
        %v540 = vand.u32 %v425, 4294901760
        %v541 = vsub.f32 %v425, %v540
        %542 = vmatpush.msra.mxu0 %v541
        %v543 = vand.u32 %v424, 4294901760
        %v544 = vsub.f32 %v424, %v543
        %545 = vmatpush.msra.mxu0 %v544
        %v546 = vand.u32 %v423, 4294901760
        %v547 = vsub.f32 %v423, %v546
        %548 = vmatpush.msra.mxu0 %v547
        %v549 = vand.u32 %v422, 4294901760
        %v550 = vsub.f32 %v422, %v549
        %551 = vmatpush.msra.mxu0 %v550
        %v552 = vand.u32 %v421, 4294901760
        %v553 = vsub.f32 %v421, %v552
        %554 = vmatpush.msra.mxu0 %v553
        %v555 = vand.u32 %v420, 4294901760
        %v556 = vsub.f32 %v420, %v555
        %557 = vmatpush.msra.mxu0 %v556
        %v558 = vand.u32 %v419, 4294901760
        %v559 = vsub.f32 %v419, %v558
        %560 = vmatpush.msra.mxu0 %v559
        %v561 = vand.u32 %v433, 4294901760
        %v562 = vsub.f32 %v433, %v561
        %563 = vmatmul.f32.gmra.mxu0 %v562
        %v564 = vpop.f32.mrf.mxu0
        %v565 = vadd.f32 %v527, %v564
        %566 = vdwg.mxu0
        %567 = vmatpush.msra.mxu0 0.0
        %568 = vmatpush.msra.mxu0 0.0
        %569 = vmatpush.msra.mxu0 0.0
        %570 = vmatpush.msra.mxu0 0.0
        %571 = vmatpush.msra.mxu0 0.0
        %572 = vmatpush.msra.mxu0 0.0
        %573 = vmatpush.msra.mxu0 0.0
        %574 = vmatpush.msra.mxu0 0.0
        %v575 = vand.u32 %v426, 4294901760
        %576 = vmatpush.msra.mxu0 %v575
        %v577 = vand.u32 %v425, 4294901760
        %578 = vmatpush.msra.mxu0 %v577
        %v579 = vand.u32 %v424, 4294901760
        %580 = vmatpush.msra.mxu0 %v579
        %v581 = vand.u32 %v423, 4294901760
        %582 = vmatpush.msra.mxu0 %v581
        %v583 = vand.u32 %v422, 4294901760
        %584 = vmatpush.msra.mxu0 %v583
        %v585 = vand.u32 %v421, 4294901760
        %586 = vmatpush.msra.mxu0 %v585
        %v587 = vand.u32 %v420, 4294901760
        %588 = vmatpush.msra.mxu0 %v587
        %v589 = vand.u32 %v419, 4294901760
        %590 = vmatpush.msra.mxu0 %v589
        %v591 = vand.u32 %v433, 4294901760
        %v592 = vsub.f32 %v433, %v591
        %v593 = vand.u32 %v592, 4294901760
        %594 = vmatmul.f32.gmra.mxu0 %v593
        %v595 = vpop.f32.mrf.mxu0
        %v596 = vadd.f32 %v565, %v595
        %597 = vdwg.mxu0
        %598 = vmatpush.msra.mxu0 0.0
        %599 = vmatpush.msra.mxu0 0.0
        %600 = vmatpush.msra.mxu0 0.0
        %601 = vmatpush.msra.mxu0 0.0
        %602 = vmatpush.msra.mxu0 0.0
        %603 = vmatpush.msra.mxu0 0.0
        %604 = vmatpush.msra.mxu0 0.0
        %605 = vmatpush.msra.mxu0 0.0
        %v606 = vand.u32 %v426, 4294901760
        %v607 = vsub.f32 %v426, %v606
        %v608 = vand.u32 %v607, 4294901760
        %609 = vmatpush.msra.mxu0 %v608
        %v610 = vand.u32 %v425, 4294901760
        %v611 = vsub.f32 %v425, %v610
        %v612 = vand.u32 %v611, 4294901760
        %613 = vmatpush.msra.mxu0 %v612
        %v614 = vand.u32 %v424, 4294901760
        %v615 = vsub.f32 %v424, %v614
        %v616 = vand.u32 %v615, 4294901760
        %617 = vmatpush.msra.mxu0 %v616
        %v618 = vand.u32 %v423, 4294901760
        %v619 = vsub.f32 %v423, %v618
        %v620 = vand.u32 %v619, 4294901760
        %621 = vmatpush.msra.mxu0 %v620
        %v622 = vand.u32 %v422, 4294901760
        %v623 = vsub.f32 %v422, %v622
        %v624 = vand.u32 %v623, 4294901760
        %625 = vmatpush.msra.mxu0 %v624
        %v626 = vand.u32 %v421, 4294901760
        %v627 = vsub.f32 %v421, %v626
        %v628 = vand.u32 %v627, 4294901760
        %629 = vmatpush.msra.mxu0 %v628
        %v630 = vand.u32 %v420, 4294901760
        %v631 = vsub.f32 %v420, %v630
        %v632 = vand.u32 %v631, 4294901760
        %633 = vmatpush.msra.mxu0 %v632
        %v634 = vand.u32 %v419, 4294901760
        %v635 = vsub.f32 %v419, %v634
        %v636 = vand.u32 %v635, 4294901760
        %637 = vmatpush.msra.mxu0 %v636
        %v638 = vand.u32 %v433, 4294901760
        %639 = vmatmul.f32.gmra.mxu0 %v638
        %v640 = vpop.f32.mrf.mxu0
        %v641 = vadd.f32 %v596, %v640
        %642 = vdwg.mxu0
        %643 = vmatpush.msra.mxu0 0.0
        %644 = vmatpush.msra.mxu0 0.0
        %645 = vmatpush.msra.mxu0 0.0
        %646 = vmatpush.msra.mxu0 0.0
        %647 = vmatpush.msra.mxu0 0.0
        %648 = vmatpush.msra.mxu0 0.0
        %649 = vmatpush.msra.mxu0 0.0
        %650 = vmatpush.msra.mxu0 0.0
        %v651 = vand.u32 %v426, 4294901760
        %652 = vmatpush.msra.mxu0 %v651
        %v653 = vand.u32 %v425, 4294901760
        %654 = vmatpush.msra.mxu0 %v653
        %v655 = vand.u32 %v424, 4294901760
        %656 = vmatpush.msra.mxu0 %v655
        %v657 = vand.u32 %v423, 4294901760
        %658 = vmatpush.msra.mxu0 %v657
        %v659 = vand.u32 %v422, 4294901760
        %660 = vmatpush.msra.mxu0 %v659
        %v661 = vand.u32 %v421, 4294901760
        %662 = vmatpush.msra.mxu0 %v661
        %v663 = vand.u32 %v420, 4294901760
        %664 = vmatpush.msra.mxu0 %v663
        %v665 = vand.u32 %v419, 4294901760
        %666 = vmatpush.msra.mxu0 %v665
        %v667 = vand.u32 %v433, 4294901760
        %668 = vmatmul.f32.gmra.mxu0 %v667
        %v669 = vpop.f32.mrf.mxu0
        %v670 = vadd.f32 %v641, %v669
        %671 = vdwg.mxu0
        %672 = vst.msk [vmem:[%s215] sm:$0xff] %vm229, %v670
        %s673 = sand.u32 %s137, 1
        %s674 = scalar_lea.sflag [#allocation3], %s673
        %s675 = sand.u32 %s137, 1
        %s676 = smul.addr %s675, 8
        %s677 = scalar_lea.vmem [#allocation2], %s676
        // Predicated region
        $region41: #{tpu_custom_call.1} parent=39 // pred_check
          %p678 = pneg %p147
        $region42: #{tpu_custom_call.1} parent=39 // pred_check_branch
          %680 = sbr.rel (%p678) target = $region44
        $region43: #{tpu_custom_call.1} parent=39 // pred_region
          %682 = vsyncadd %s674, 0
          %s683 = smul.addr %s19, 8
          %s684 = scalar_lea.hbm %s5, %s683
          %s686 = sshll.u32 %s677, 4
          %s687 = int_to_ptr.vmem [resolvable:$true] %s686
          %s688 = sshll.u32 %s684, 4
          %s689 = int_to_ptr.hbm [resolvable:$true] %s688
          %691 = dma.vmem_to_hbm [thread:$0]  %s687, 128, %s689, %s674
        $region44: #{tpu_custom_call.1} parent=39 // pred_fallthru
          _
      $region40: #{tpu_custom_call.1} parent=5 // pred_fallthru
        _
      %p692 = scmp.le.s32.totalorder 2, %s14
      // Predicated region
      $region45: #{tpu_custom_call.1} parent=5 // pred_check
        %p693 = pneg %p692
      $region46: #{tpu_custom_call.1} parent=5 // pred_check_branch
        %695 = sbr.rel (%p693) target = $region48
      $region47: #{tpu_custom_call.1} parent=5 // pred_region
        %s696 = ssub.s32 %s14, 2
        // Predicated region
        $region49: #{tpu_custom_call.1} parent=47 // pred_check
          %p697 = pneg %p153
        $region50: #{tpu_custom_call.1} parent=47 // pred_check_branch
          %699 = sbr.rel (%p697) target = $region52
        $region51: #{tpu_custom_call.1} parent=47 // pred_region
          %s700 = sand.u32 %s138, 1
          %s701 = scalar_lea.sflag [#allocation3], %s700
          %s702 = sand.u32 %s138, 1
          %s703 = smul.addr %s702, 8
          %s704 = scalar_lea.vmem [#allocation2], %s703
          %706 = dma.done %s701, 128
        $region52: #{tpu_custom_call.1} parent=47 // pred_fallthru
          _
      $region48: #{tpu_custom_call.1} parent=5 // pred_fallthru
        _
    $region6: #{tpu_custom_call.1} parent=1 // loop_footer
      %s18 = sadd.s32 1, %s14
    $region7: #{tpu_custom_call.1} parent=1 // loop_footer_branch
      %13 = sbr.rel target = $region3
    $region8: #{tpu_custom_call.1} parent=1 // loop_exit
      _
    %707 = vsyncpa [#allocation3], 1
    %s708 = scalar_lea.sflag [#allocation3], 1
    %709 = vsyncpa %s708, 1

</llo_original>
